<compile_context>
chip_gen: v6e
topology: v6e:2x2x1
jax: 0.10.0
libtpu: 0.0.40
codegen_flags: <defaults>
</compile_context>

<pallas_src>
import jax
import jax.numpy as jnp
from jax.experimental import pallas as pl
from jax.experimental.pallas import tpu as pltpu


def e2e_kernel(x_ref, w_ref, o_ref):
    # x: (2*C*d, N*d*d);  w: (P, 2*C*d);  o: (P, N*d*d)
    o_ref[...] = jax.lax.dot_general(
        w_ref[...], x_ref[...],
        dimension_numbers=(((1,), (0,)), ((), ())),
        preferred_element_type=jnp.float32,
    ).astype(o_ref.dtype)


def e2e_block(x, w1, w2):
    """x: (N, C, d, d); w1: (P, C, 1, d); w2: (P, C, d, 1) -> (N, P, d, d)."""
    N, C, d, _ = x.shape
    P = w1.shape[0]

    # Wrapper-side layout plumbing (pure XLA, done once):
    #   row branch: X'[(0,c,k), (n,i,j)] = x[n,c,i,k]   (independent of j)
    #   col branch: X'[(1,c,k), (n,i,j)] = x[n,c,k,j]   (independent of i)
    x1 = jnp.broadcast_to(
        jnp.transpose(x, (1, 3, 0, 2))[:, :, :, :, None], (C, d, N, d, d))
    x2 = jnp.broadcast_to(
        jnp.transpose(x, (1, 2, 0, 3))[:, :, :, None, :], (C, d, N, d, d))
    x_fused = jnp.concatenate(
        [x1.reshape(C * d, N * d * d), x2.reshape(C * d, N * d * d)], axis=0)
    # W'[p, (0,c,k)] = w1[p,c,0,k];  W'[p, (1,c,k)] = w2[p,c,k,0]
    w_fused = jnp.concatenate(
        [w1.reshape(P, C * d), w2.reshape(P, C * d)], axis=1)

    itemsize = jnp.dtype(x.dtype).itemsize
    flops = 2 * P * (2 * C * d) * (N * d * d)
    bytes_accessed = (x_fused.size + w_fused.size + P * N * d * d) * itemsize

    out_pn = pl.pallas_call(
        e2e_kernel,
        out_shape=jax.ShapeDtypeStruct((P, N * d * d), x.dtype),
        in_specs=[
            pl.BlockSpec(memory_space=pltpu.MemorySpace.VMEM),
            pl.BlockSpec(memory_space=pltpu.MemorySpace.VMEM),
        ],
        out_specs=pl.BlockSpec(memory_space=pltpu.MemorySpace.VMEM),
        cost_estimate=pl.CostEstimate(
            flops=flops, transcendentals=0, bytes_accessed=bytes_accessed),
    )(x_fused, w_fused)

    # (P, N*d*d) lane-dense kernel output -> (N, P, d, d) module output.
    return jnp.transpose(out_pn.reshape(P, N, d, d), (1, 0, 2, 3))


def e2e_block_ref(x, w1, w2):
    """Pure-JAX reference of the PyTorch forward (for correctness check)."""
    a = jnp.einsum('ncik,pck->npi', x, w1[:, :, 0, :])   # cnn1, kernel (1, d)
    b = jnp.einsum('nckj,pck->npj', x, w2[:, :, :, 0])   # cnn2, kernel (d, 1)
    return a[:, :, :, None] + b[:, :, None, :]


if __name__ == "__main__":
    # Small shapes consistent with the module: batch=2, in_planes=4, planes=8,
    # spatial size d=16 (E2EBlock uses example.size(3) as the kernel extent).
    N, C_in, P, d = 2, 4, 8, 16

    key = jax.random.PRNGKey(0)
    kx, k1, k2 = jax.random.split(key, 3)
    x = jax.random.normal(kx, (N, C_in, d, d), dtype=jnp.float32)
    # Same shapes as Conv2d(.., (1,d)) / (.., (d,1)) weights, bias=False.
    w1 = jax.random.normal(k1, (P, C_in, 1, d), dtype=jnp.float32) * 0.1
    w2 = jax.random.normal(k2, (P, C_in, d, 1), dtype=jnp.float32) * 0.1

    out = e2e_block(x, w1, w2)
    out = jax.block_until_ready(out)

    ref = e2e_block_ref(x, w1, w2)
    assert out.shape == (N, P, d, d)
    assert jnp.allclose(out, ref, atol=1e-4, rtol=1e-4), "mismatch vs reference"

    print("KERNEL_OK")
</pallas_src>

<mosaic_0001>
module attributes {stable_mosaic.version = 11 : i64} {
  func.func @e2e_kernel(%arg0: memref<128x512xf32, #tpu.memory_space<vmem>>, %arg1: memref<8x128xf32, #tpu.memory_space<vmem>>, %arg2: memref<8x512xf32, #tpu.memory_space<vmem>>) attributes {dimension_semantics = [], scalar_prefetch = 0 : i64, scratch_operands = 0 : i64, tpu.core_type = #tpu.core_type<tc>} {
    %c0 = arith.constant 0 : index
    %c0_0 = arith.constant 0 : index
    %0 = vector.load %arg1[%c0, %c0_0] : memref<8x128xf32, #tpu.memory_space<vmem>>, vector<8x128xf32>
    %c0_1 = arith.constant 0 : index
    %c0_2 = arith.constant 0 : index
    %1 = vector.load %arg0[%c0_1, %c0_2] : memref<128x512xf32, #tpu.memory_space<vmem>>, vector<128x512xf32>
    %cst = arith.constant dense<0.000000e+00> : vector<8x512xf32>
    %2 = tpu.matmul %0, %1, %cst {dimension_numbers = #tpu.dot_dimension_numbers<[1], [0], [0], [1], [0, 0, 1, 1], [], []>} : vector<8x128xf32>, vector<128x512xf32>, vector<8x512xf32> -> vector<8x512xf32>
    %c0_3 = arith.constant 0 : index
    %c0_4 = arith.constant 0 : index
    %3 = vector.load %arg2[%c0_3, %c0_4] : memref<8x512xf32, #tpu.memory_space<vmem>>, vector<8x512xf32>
    tpu.vector_store %arg2[%c0_3, %c0_4], %2 {strides = array<i32>} : memref<8x512xf32, #tpu.memory_space<vmem>>, vector<8x512xf32>,
    return
  }
}

</mosaic_0001>

<llo_original>
// kernel: tpu_custom_call.1
$region0: #{tpu_custom_call.1}
  #allocation0 [shape = 'u32[]', space=smem, size = 0x4, offset = 0x4, fixed_abs, tag = 'smem constant byte address 0x4 - core index']
  #allocation1 [shape = 'u32[144,128]{1,0:T(1,128)}', space=vmem, size = 0x12000, scoped, tag = 'internal scratch']
  %s0 = inlined_call_operand.hbm [shape: f32[128,512], index: 0, kind: input, shape index: {}]
  %s1 = inlined_call_operand.hbm [shape: f32[8,128], index: 1, kind: input, shape index: {}]
  %s2 = inlined_call_operand.hbm [shape: f32[8,512], index: 2, kind: output, shape index: {}]
  %s3 = sld [smem:[#allocation0]]
  $region26: #{tpu_custom_call.1} parent=0
    _
  %s5 = ssub.s32 1, %s3
  %s6 = scalar_select 0, %s5, %s3
  $region1: #{tpu_custom_call.1} parent=0
    #allocation2 [shape = 'u8[262144]{0}', space=vmem, size = 0x40000, scoped, tag = 'input window, operand 0, single buffered']
    #allocation3 [shape = 's32[1]{0}', space=sflag, size = 0x4, scoped, tag = 'scoped memory for tpu_custom_call.1']
    #allocation4 [shape = 's32[1]{0}', space=sflag, size = 0x4, scoped, tag = 'scoped memory for tpu_custom_call.1']
    #allocation5 [shape = 'u8[4096]{0}', space=vmem, size = 0x1000, scoped, tag = 'input window, operand 1, single buffered']
    #allocation6 [shape = 's32[1]{0}', space=sflag, size = 0x4, scoped, tag = 'scoped memory for tpu_custom_call.1']
    #allocation7 [shape = 'u8[16384]{0}', space=vmem, size = 0x4000, scoped, tag = 'output window, operand 0, single buffered']
    %7 = vsyncpa [#allocation3], 0
    %8 = vsyncpa [#allocation6], 0
    %9 = vsyncpa [#allocation4], 0
    // Predicated region
    $region2: #{tpu_custom_call.1} parent=1 // pred_check
      _
    $region3: #{tpu_custom_call.1} parent=1 // pred_check_branch
      %11 = sbr.rel (0) target = $region5
    $region4: #{tpu_custom_call.1} parent=1 // pred_region
      %s13 = ssub.s32 8192, 8192
      %14 = vsyncadd [#allocation3], %s13
      %s15 = sshll.u32 [#allocation2], 4
      %s16 = int_to_ptr.vmem [resolvable:$true] %s15
      %21 = dma.hbm_to_vmem [thread:$0]  %s0, 8192, %s16, [#allocation3], 512, 512, 32
    $region5: #{tpu_custom_call.1} parent=1 // pred_fallthru
      _
    // Predicated region
    $region6: #{tpu_custom_call.1} parent=1 // pred_check
      _
    $region7: #{tpu_custom_call.1} parent=1 // pred_check_branch
      %23 = sbr.rel (0) target = $region9
    $region8: #{tpu_custom_call.1} parent=1 // pred_region
      %s25 = ssub.s32 128, 128
      %26 = vsyncadd [#allocation6], %s25
      %s28 = sshll.u32 [#allocation5], 4
      %s29 = int_to_ptr.vmem [resolvable:$true] %s28
      %31 = dma.hbm_to_vmem [thread:$0]  %s1, 128, %s29, [#allocation6]
    $region9: #{tpu_custom_call.1} parent=1 // pred_fallthru
      _
    // Predicated region
    $region10: #{tpu_custom_call.1} parent=1 // pred_check
      _
    $region11: #{tpu_custom_call.1} parent=1 // pred_check_branch
      %33 = sbr.rel (0) target = $region13
    $region12: #{tpu_custom_call.1} parent=1 // pred_region
      %34 = dma.done [#allocation3], 8192
    $region13: #{tpu_custom_call.1} parent=1 // pred_fallthru
      _
    // Predicated region
    $region14: #{tpu_custom_call.1} parent=1 // pred_check
      _
    $region15: #{tpu_custom_call.1} parent=1 // pred_check_branch
      %36 = sbr.rel (0) target = $region17
    $region16: #{tpu_custom_call.1} parent=1 // pred_region
      %37 = dma.done [#allocation6], 128
    $region17: #{tpu_custom_call.1} parent=1 // pred_fallthru
      _
    %v38 = vld [vmem:[#allocation5] sm:$0xff]
    %v39 = vld [vmem:[#allocation2] sm:$0xff]
    %v40 = vld [vmem:[#allocation2 + $0x8] sm:$0xff]
    %v41 = vld [vmem:[#allocation2 + $0x10] sm:$0xff]
    %v42 = vld [vmem:[#allocation2 + $0x18] sm:$0xff]
    %v43 = vld [vmem:[#allocation2 + $0x20] sm:$0xff]
    %v44 = vld [vmem:[#allocation2 + $0x28] sm:$0xff]
    %v45 = vld [vmem:[#allocation2 + $0x30] sm:$0xff]
    %v46 = vld [vmem:[#allocation2 + $0x38] sm:$0xff]
    %v47 = vld [vmem:[#allocation2 + $0x40] sm:$0xff]
    %v48 = vld [vmem:[#allocation2 + $0x48] sm:$0xff]
    %v49 = vld [vmem:[#allocation2 + $0x50] sm:$0xff]
    %v50 = vld [vmem:[#allocation2 + $0x58] sm:$0xff]
    %v51 = vld [vmem:[#allocation2 + $0x60] sm:$0xff]
    %v52 = vld [vmem:[#allocation2 + $0x68] sm:$0xff]
    %v53 = vld [vmem:[#allocation2 + $0x70] sm:$0xff]
    %v54 = vld [vmem:[#allocation2 + $0x78] sm:$0xff]
    %v55 = vld [vmem:[#allocation2 + $0x80] sm:$0xff]
    %v56 = vld [vmem:[#allocation2 + $0x88] sm:$0xff]
    %v57 = vld [vmem:[#allocation2 + $0x90] sm:$0xff]
    %v58 = vld [vmem:[#allocation2 + $0x98] sm:$0xff]
    %v59 = vld [vmem:[#allocation2 + $0xa0] sm:$0xff]
    %v60 = vld [vmem:[#allocation2 + $0xa8] sm:$0xff]
    %v61 = vld [vmem:[#allocation2 + $0xb0] sm:$0xff]
    %v62 = vld [vmem:[#allocation2 + $0xb8] sm:$0xff]
    %v63 = vld [vmem:[#allocation2 + $0xc0] sm:$0xff]
    %v64 = vld [vmem:[#allocation2 + $0xc8] sm:$0xff]
    %v65 = vld [vmem:[#allocation2 + $0xd0] sm:$0xff]
    %v66 = vld [vmem:[#allocation2 + $0xd8] sm:$0xff]
    %v67 = vld [vmem:[#allocation2 + $0xe0] sm:$0xff]
    %v68 = vld [vmem:[#allocation2 + $0xe8] sm:$0xff]
    %v69 = vld [vmem:[#allocation2 + $0xf0] sm:$0xff]
    %v70 = vld [vmem:[#allocation2 + $0xf8] sm:$0xff]
    %v71 = vld [vmem:[#allocation2 + $0x100] sm:$0xff]
    %v72 = vld [vmem:[#allocation2 + $0x108] sm:$0xff]
    %v73 = vld [vmem:[#allocation2 + $0x110] sm:$0xff]
    %v74 = vld [vmem:[#allocation2 + $0x118] sm:$0xff]
    %v75 = vld [vmem:[#allocation2 + $0x120] sm:$0xff]
    %v76 = vld [vmem:[#allocation2 + $0x128] sm:$0xff]
    %v77 = vld [vmem:[#allocation2 + $0x130] sm:$0xff]
    %v78 = vld [vmem:[#allocation2 + $0x138] sm:$0xff]
    %v79 = vld [vmem:[#allocation2 + $0x140] sm:$0xff]
    %v80 = vld [vmem:[#allocation2 + $0x148] sm:$0xff]
    %v81 = vld [vmem:[#allocation2 + $0x150] sm:$0xff]
    %v82 = vld [vmem:[#allocation2 + $0x158] sm:$0xff]
    %v83 = vld [vmem:[#allocation2 + $0x160] sm:$0xff]
    %v84 = vld [vmem:[#allocation2 + $0x168] sm:$0xff]
    %v85 = vld [vmem:[#allocation2 + $0x170] sm:$0xff]
    %v86 = vld [vmem:[#allocation2 + $0x178] sm:$0xff]
    %v87 = vld [vmem:[#allocation2 + $0x180] sm:$0xff]
    %v88 = vld [vmem:[#allocation2 + $0x188] sm:$0xff]
    %v89 = vld [vmem:[#allocation2 + $0x190] sm:$0xff]
    %v90 = vld [vmem:[#allocation2 + $0x198] sm:$0xff]
    %v91 = vld [vmem:[#allocation2 + $0x1a0] sm:$0xff]
    %v92 = vld [vmem:[#allocation2 + $0x1a8] sm:$0xff]
    %v93 = vld [vmem:[#allocation2 + $0x1b0] sm:$0xff]
    %v94 = vld [vmem:[#allocation2 + $0x1b8] sm:$0xff]
    %v95 = vld [vmem:[#allocation2 + $0x1c0] sm:$0xff]
    %v96 = vld [vmem:[#allocation2 + $0x1c8] sm:$0xff]
    %v97 = vld [vmem:[#allocation2 + $0x1d0] sm:$0xff]
    %v98 = vld [vmem:[#allocation2 + $0x1d8] sm:$0xff]
    %v99 = vld [vmem:[#allocation2 + $0x1e0] sm:$0xff]
    %v100 = vld [vmem:[#allocation2 + $0x1e8] sm:$0xff]
    %v101 = vld [vmem:[#allocation2 + $0x1f0] sm:$0xff]
    %v102 = vld [vmem:[#allocation2 + $0x1f8] sm:$0xff]
    %103 = vmatprep.subr.mxu0 %v100
    %104 = vmatpush1.msra.mxu0 %v99
    %105 = vmatprep.subr.mxu0 %v96
    %106 = vmatpush1.msra.mxu0 %v95
    %107 = vmatprep.subr.mxu0 %v92
    %108 = vmatpush1.msra.mxu0 %v91
    %109 = vmatprep.subr.mxu0 %v88
    %110 = vmatpush1.msra.mxu0 %v87
    %111 = vmatprep.subr.mxu0 %v84
    %112 = vmatpush1.msra.mxu0 %v83
    %113 = vmatprep.subr.mxu0 %v80
    %114 = vmatpush1.msra.mxu0 %v79
    %115 = vmatprep.subr.mxu0 %v76
    %116 = vmatpush1.msra.mxu0 %v75
    %117 = vmatprep.subr.mxu0 %v72
    %118 = vmatpush1.msra.mxu0 %v71
    %119 = vmatprep.subr.mxu0 %v68
    %120 = vmatpush1.msra.mxu0 %v67
    %121 = vmatprep.subr.mxu0 %v64
    %122 = vmatpush1.msra.mxu0 %v63
    %123 = vmatprep.subr.mxu0 %v60
    %124 = vmatpush1.msra.mxu0 %v59
    %125 = vmatprep.subr.mxu0 %v56
    %126 = vmatpush1.msra.mxu0 %v55
    %127 = vmatprep.subr.mxu0 %v52
    %128 = vmatpush1.msra.mxu0 %v51
    %129 = vmatprep.subr.mxu0 %v48
    %130 = vmatpush1.msra.mxu0 %v47
    %131 = vmatprep.subr.mxu0 %v44
    %132 = vmatpush1.msra.mxu0 %v43
    %133 = vmatprep.subr.mxu0 %v40
    %134 = vmatpush1.msra.mxu0 %v39
    %135 = vmatprep.subr.mxu0 0.0
    %136 = vmatpush2.msra.mxu0 0.0
    %137 = vmatprep.subr.mxu0 0.0
    %138 = vmatpush2.msra.mxu0 0.0
    %139 = vmatprep.subr.mxu0 0.0
    %140 = vmatpush2.msra.mxu0 0.0
    %141 = vmatprep.subr.mxu0 0.0
    %142 = vmatpush2.msra.mxu0 0.0
    %143 = vmatprep.subr.mxu0 0.0
    %144 = vmatpush2.msra.mxu0 0.0
    %145 = vmatprep.subr.mxu0 0.0
    %146 = vmatpush2.msra.mxu0 0.0
    %147 = vmatprep.subr.mxu0 0.0
    %148 = vmatpush2.msra.mxu0 0.0
    %149 = vmatprep.subr.mxu0 0.0
    %150 = vmatpush2.msra.mxu0 0.0
    %151 = vmatprep.subr.mxu0 0.0
    %152 = vmatpush2.msra.mxu0 0.0
    %153 = vmatprep.subr.mxu0 0.0
    %154 = vmatpush2.msra.mxu0 0.0
    %155 = vmatprep.subr.mxu0 0.0
    %156 = vmatpush2.msra.mxu0 0.0
    %157 = vmatprep.subr.mxu0 0.0
    %158 = vmatpush2.msra.mxu0 0.0
    %159 = vmatprep.subr.mxu0 0.0
    %160 = vmatpush2.msra.mxu0 0.0
    %161 = vmatprep.subr.mxu0 0.0
    %162 = vmatpush2.msra.mxu0 0.0
    %163 = vmatprep.subr.mxu0 0.0
    %164 = vmatpush2.msra.mxu0 0.0
    %165 = vmatprep.subr.mxu0 0.0
    %166 = vmatpush2.msra.mxu0 0.0
    %167 = vmatprep.mubr.f32.mxu0 0.0
    %168 = vmatmul.mubr.f32.gmra.mxu0 %v38
    %v169 = vpop.f32.mrf.mxu0
    %v170 = vadd.f32 0.0, %v169
    %v171 = vpop.f32.mrf.mxu0
    %v172 = vadd.f32 0.0, %v171
    %173 = vdwg.mxu0
    %174 = vmatprep.subr.mxu0 %v102
    %175 = vmatpush1.msra.mxu0 %v101
    %176 = vmatprep.subr.mxu0 %v98
    %177 = vmatpush1.msra.mxu0 %v97
    %178 = vmatprep.subr.mxu0 %v94
    %179 = vmatpush1.msra.mxu0 %v93
    %180 = vmatprep.subr.mxu0 %v90
    %181 = vmatpush1.msra.mxu0 %v89
    %182 = vmatprep.subr.mxu0 %v86
    %183 = vmatpush1.msra.mxu0 %v85
    %184 = vmatprep.subr.mxu0 %v82
    %185 = vmatpush1.msra.mxu0 %v81
    %186 = vmatprep.subr.mxu0 %v78
    %187 = vmatpush1.msra.mxu0 %v77
    %188 = vmatprep.subr.mxu0 %v74
    %189 = vmatpush1.msra.mxu0 %v73
    %190 = vmatprep.subr.mxu0 %v70
    %191 = vmatpush1.msra.mxu0 %v69
    %192 = vmatprep.subr.mxu0 %v66
    %193 = vmatpush1.msra.mxu0 %v65
    %194 = vmatprep.subr.mxu0 %v62
    %195 = vmatpush1.msra.mxu0 %v61
    %196 = vmatprep.subr.mxu0 %v58
    %197 = vmatpush1.msra.mxu0 %v57
    %198 = vmatprep.subr.mxu0 %v54
    %199 = vmatpush1.msra.mxu0 %v53
    %200 = vmatprep.subr.mxu0 %v50
    %201 = vmatpush1.msra.mxu0 %v49
    %202 = vmatprep.subr.mxu0 %v46
    %203 = vmatpush1.msra.mxu0 %v45
    %204 = vmatprep.subr.mxu0 %v42
    %205 = vmatpush1.msra.mxu0 %v41
    %206 = vmatprep.subr.mxu0 0.0
    %207 = vmatpush2.msra.mxu0 0.0
    %208 = vmatprep.subr.mxu0 0.0
    %209 = vmatpush2.msra.mxu0 0.0
    %210 = vmatprep.subr.mxu0 0.0
    %211 = vmatpush2.msra.mxu0 0.0
    %212 = vmatprep.subr.mxu0 0.0
    %213 = vmatpush2.msra.mxu0 0.0
    %214 = vmatprep.subr.mxu0 0.0
    %215 = vmatpush2.msra.mxu0 0.0
    %216 = vmatprep.subr.mxu0 0.0
    %217 = vmatpush2.msra.mxu0 0.0
    %218 = vmatprep.subr.mxu0 0.0
    %219 = vmatpush2.msra.mxu0 0.0
    %220 = vmatprep.subr.mxu0 0.0
    %221 = vmatpush2.msra.mxu0 0.0
    %222 = vmatprep.subr.mxu0 0.0
    %223 = vmatpush2.msra.mxu0 0.0
    %224 = vmatprep.subr.mxu0 0.0
    %225 = vmatpush2.msra.mxu0 0.0
    %226 = vmatprep.subr.mxu0 0.0
    %227 = vmatpush2.msra.mxu0 0.0
    %228 = vmatprep.subr.mxu0 0.0
    %229 = vmatpush2.msra.mxu0 0.0
    %230 = vmatprep.subr.mxu0 0.0
    %231 = vmatpush2.msra.mxu0 0.0
    %232 = vmatprep.subr.mxu0 0.0
    %233 = vmatpush2.msra.mxu0 0.0
    %234 = vmatprep.subr.mxu0 0.0
    %235 = vmatpush2.msra.mxu0 0.0
    %236 = vmatprep.subr.mxu0 0.0
    %237 = vmatpush2.msra.mxu0 0.0
    %238 = vmatprep.mubr.f32.mxu0 0.0
    %239 = vmatmul.mubr.f32.gmra.mxu0 %v38
    %v240 = vpop.f32.mrf.mxu0
    %v241 = vadd.f32 0.0, %v240
    %v242 = vpop.f32.mrf.mxu0
    %v243 = vadd.f32 0.0, %v242
    %244 = vdwg.mxu0
    %245 = vst [vmem:[#allocation7] sm:$0xff] %v170
    %246 = vst [vmem:[#allocation7 + $0x8] sm:$0xff] %v172
    %247 = vst [vmem:[#allocation7 + $0x10] sm:$0xff] %v241
    %248 = vst [vmem:[#allocation7 + $0x18] sm:$0xff] %v243
    // Predicated region
    $region18: #{tpu_custom_call.1} parent=1 // pred_check
      _
    $region19: #{tpu_custom_call.1} parent=1 // pred_check_branch
      %250 = sbr.rel (0) target = $region21
    $region20: #{tpu_custom_call.1} parent=1 // pred_region
      %s252 = ssub.s32 512, 512
      %253 = vsyncadd [#allocation4], %s252
      %s255 = sshll.u32 [#allocation7], 4
      %s256 = int_to_ptr.vmem [resolvable:$true] %s255
      %258 = dma.vmem_to_hbm [thread:$0]  %s256, 512, %s2, [#allocation4]
    $region21: #{tpu_custom_call.1} parent=1 // pred_fallthru
      _
    // Predicated region
    $region22: #{tpu_custom_call.1} parent=1 // pred_check
      _
    $region23: #{tpu_custom_call.1} parent=1 // pred_check_branch
      %260 = sbr.rel (0) target = $region25
    $region24: #{tpu_custom_call.1} parent=1 // pred_region
      %261 = dma.done [#allocation4], 512
    $region25: #{tpu_custom_call.1} parent=1 // pred_fallthru
      _
    %262 = vsyncpa [#allocation3], 1
    %263 = vsyncpa [#allocation6], 1
    %264 = vsyncpa [#allocation4], 1

</llo_original>
